<compile_context>
chip_gen: v6e
topology: v6e:2x2x1
jax: 0.10.0
libtpu: 0.0.40
codegen_flags: <defaults>
</compile_context>

<pallas_src>
import functools

import jax
import jax.numpy as jnp
from jax.experimental import pallas as pl
from jax.experimental.pallas import tpu as pltpu


def _round_up(x: int, m: int) -> int:
    return ((x + m - 1) // m) * m


def ffn_kernel(x_ref, w1_ref, b1_ref, w2_ref, pgb_ref, o_ref, acc_ref, *, eps: float):
    # Grid = (row_blocks, hid_blocks); hidden axis is last ("arbitrary", innermost).
    k = pl.program_id(1)

    @pl.when(k == 0)
    def _():
        acc_ref[...] = jnp.zeros_like(acc_ref)

    x = x_ref[...]                                   # (rt, d_in), native dtype

    # w_1 chunk: Linear(d_in -> tk); MXU in weight dtype (bf16), f32 accumulation.
    h = jnp.dot(x.astype(w1_ref.dtype), w1_ref[...],
                preferred_element_type=jnp.float32)
    h = h + b1_ref[...].astype(jnp.float32)
    h = jnp.maximum(h, 0.0)

    # w_2 chunk: Linear(tk -> d_in), accumulated over the hidden-dim grid axis.
    acc_ref[...] += jnp.dot(h.astype(w2_ref.dtype), w2_ref[...],
                            preferred_element_type=jnp.float32)

    @pl.when(k == pl.num_programs(1) - 1)
    def _():
        pgb = pgb_ref[...].astype(jnp.float32)       # (3, d_in): b2, gamma, beta
        b2 = pgb[0:1, :]
        gamma = pgb[1:2, :]
        beta = pgb[2:3, :]

        # dropout (eval mode -> identity), residual add in f32.
        y = acc_ref[...] + b2 + x.astype(jnp.float32)

        # LayerNorm over last dim (eps=1e-6), affine. rsqrt goes to the EUP slot.
        mean = jnp.mean(y, axis=-1, keepdims=True)
        centered = y - mean
        var = jnp.mean(centered * centered, axis=-1, keepdims=True)
        y_norm = centered * jax.lax.rsqrt(var + eps)
        o_ref[...] = (y_norm * gamma + beta).astype(o_ref.dtype)


def _tpu_vmem_capacity_bytes() -> int:
    try:
        return int(pltpu.get_tpu_info().vmem_capacity_bytes)
    except Exception:  # query unavailable -> conservative (v7x-sized) assumption
        return 64 * 1024 * 1024


def _choose_hid_tile(d_hid: int, max_tile: int) -> int:
    if d_hid <= max_tile:
        return d_hid
    # Prefer an exact divisor that is a multiple of 128 (no weight padding needed).
    for t in range(max_tile, 127, -128):
        if d_hid % t == 0:
            return t
    return max_tile  # weights will be zero-padded along d_hid


def positionwise_ffn(x, w1, b1, w2, b2, gamma, beta, *, eps=1e-6,
                     row_tile=None, mxu_dtype=jnp.bfloat16):
    """PositionwiseFeedForward forward pass (eval mode). x: (batch, seq, d_in)."""
    B, S, d_in = x.shape
    d_hid = w1.shape[1]
    N = B * S

    # ---- per-generation budgets, chosen at trace time (no runtime fallback) ----
    vmem_cap = _tpu_vmem_capacity_bytes()
    vmem_limit = int(0.78 * vmem_cap)            # headroom for compiler scratch

    if row_tile is None:
        # v5e/v6e (128 MiB VMEM) can afford larger row tiles than v7x (64 MiB).
        row_tile = 1024 if vmem_cap >= 100 * 1024 * 1024 else 512

    # Row tile: aim for >= 8 grid steps (>= 4 per v7x TensorCore), aligned to 256
    # (MXU M dim, also a multiple of v5e's 128), never larger than the
    # sublane-rounded row count.
    rt = min(int(row_tile), _round_up(pl.cdiv(N, 8), 256))
    rt = max(8, min(_round_up(rt, 8), _round_up(N, 8)))

    # Hidden-dim tile: single step for moderate d_hid, streamed chunks otherwise.
    tk = _choose_hid_tile(d_hid, max_tile=2048)

    # Cast weights for the MXU; residual / bias / LayerNorm math stays f32.
    if mxu_dtype is not None:
        w1 = w1.astype(mxu_dtype)
        w2 = w2.astype(mxu_dtype)

    def vmem_need(rt_, tk_):
        need = 2 * rt_ * d_in * x.dtype.itemsize              # x tile, double-buffered
        need += 2 * rt_ * d_in * x.dtype.itemsize             # out tile, double-buffered
        need += rt_ * d_in * 4                                 # f32 accumulator scratch
        need += rt_ * tk_ * 4                                  # live f32 hidden intermediate
        need += 2 * (d_in * tk_ + tk_ * d_in) * w1.dtype.itemsize   # weight buffers
        need += 2 * tk_ * 4 + 3 * d_in * 4                     # biases / affine
        return need

    # Shrink tiles if the estimated working set would overflow the VMEM budget.
    while rt > 128 and vmem_need(rt, tk) > vmem_limit:
        rt = max(128, _round_up(rt // 2, 8))
    while tk > 512 and vmem_need(rt, tk) > vmem_limit:
        tk = max(512, _round_up(tk // 2, 128))

    # Zero-pad *weights only* along d_hid if tk does not divide it (one-time, exact:
    # padded hidden units see zero weights and contribute zero). Activations are
    # never padded; the ragged last row block is handled by Pallas' masked writes.
    d_hid_p = _round_up(d_hid, tk)
    if d_hid_p != d_hid:
        w1 = jnp.pad(w1, ((0, 0), (0, d_hid_p - d_hid)))
        b1 = jnp.pad(b1, ((0, d_hid_p - d_hid),))
        w2 = jnp.pad(w2, ((0, d_hid_p - d_hid), (0, 0)))
    n_k = d_hid_p // tk

    x2d = x.reshape(N, d_in)                    # metadata-only reshape, no HBM copy
    b1_2d = b1.reshape(1, d_hid_p)
    pgb = jnp.stack([b2, gamma, beta], axis=0).astype(jnp.float32)   # (3, d_in)

    grid = (pl.cdiv(N, rt), n_k)
    n_rows_proc = grid[0] * rt

    param_bytes = sum(int(a.size) * a.dtype.itemsize for a in (w1, b1_2d, w2, pgb))
    cost = pl.CostEstimate(
        flops=4 * n_rows_proc * d_in * d_hid_p,               # two matmuls
        transcendentals=n_rows_proc,                          # one rsqrt per row
        bytes_accessed=2 * n_rows_proc * d_in * x.dtype.itemsize + param_bytes,
    )

    out = pl.pallas_call(
        functools.partial(ffn_kernel, eps=eps),
        out_shape=jax.ShapeDtypeStruct((N, d_in), x.dtype),
        grid_spec=pltpu.PrefetchScalarGridSpec(
            num_scalar_prefetch=0,
            grid=grid,
            in_specs=[
                pl.BlockSpec((rt, d_in), lambda i, k: (i, 0)),        # x rows (resident over k)
                pl.BlockSpec((d_in, tk), lambda i, k: (0, k)),        # w1 chunk
                pl.BlockSpec((1, tk), lambda i, k: (0, k)),           # b1 chunk
                pl.BlockSpec((tk, d_in), lambda i, k: (k, 0)),        # w2 chunk
                pl.BlockSpec((3, d_in), lambda i, k: (0, 0)),         # b2 / gamma / beta
            ],
            out_specs=pl.BlockSpec((rt, d_in), lambda i, k: (i, 0)),
            scratch_shapes=[pltpu.VMEM((rt, d_in), jnp.float32)],     # f32 accumulator
        ),
        compiler_params=pltpu.CompilerParams(
            dimension_semantics=("parallel", "arbitrary"),
            vmem_limit_bytes=vmem_limit,
        ),
        cost_estimate=cost,
    )(x2d, w1, b1_2d, w2, pgb)

    return out.reshape(B, S, d_in)


def reference_ffn(x, w1, b1, w2, b2, gamma, beta, eps=1e-6):
    h = jnp.maximum(x @ w1 + b1, 0.0)
    y = h @ w2 + b2
    y = y + x
    mean = jnp.mean(y, axis=-1, keepdims=True)
    var = jnp.mean((y - mean) ** 2, axis=-1, keepdims=True)
    return (y - mean) / jnp.sqrt(var + eps) * gamma + beta


if __name__ == "__main__":
    key = jax.random.PRNGKey(0)
    # d_in >= 256 so both matmuls fill the 256-wide MXU on v6e/v7x.
    B, S, d_in, d_hid = 2, 8, 256, 512

    k_x, k_w1, k_b1, k_w2, k_b2 = jax.random.split(key, 5)

    # Deterministic parameter init mimicking nn.Linear default (uniform +/- 1/sqrt(fan_in)).
    bound1 = 1.0 / jnp.sqrt(d_in)
    bound2 = 1.0 / jnp.sqrt(d_hid)
    # Weights stored as (in, out) so the kernel does x @ W (== PyTorch x @ W.T).
    w1 = jax.random.uniform(k_w1, (d_in, d_hid), jnp.float32, -bound1, bound1)
    b1 = jax.random.uniform(k_b1, (d_hid,), jnp.float32, -bound1, bound1)
    w2 = jax.random.uniform(k_w2, (d_hid, d_in), jnp.float32, -bound2, bound2)
    b2 = jax.random.uniform(k_b2, (d_in,), jnp.float32, -bound2, bound2)
    gamma = jnp.ones((d_in,), jnp.float32)   # LayerNorm weight init
    beta = jnp.zeros((d_in,), jnp.float32)   # LayerNorm bias init

    x = jax.random.normal(k_x, (B, S, d_in), jnp.float32)

    out = positionwise_ffn(x, w1, b1, w2, b2, gamma, beta)
    out = jax.block_until_ready(out)

    ref = reference_ffn(x, w1, b1, w2, b2, gamma, beta)
    assert out.shape == (B, S, d_in)
    # bf16 MXU operands with f32 accumulation differ from the pure-f32 reference
    # at the ~1e-3 level; tolerance loosened accordingly.
    assert jnp.allclose(out, ref, atol=2e-2, rtol=2e-2)

    print("KERNEL_OK")
</pallas_src>

<mosaic_0001>
module attributes {stable_mosaic.version = 11 : i64} {
  func.func @ffn_kernel(%arg0: i32, %arg1: i32, %arg2: memref<16x256xf32, #tpu.memory_space<vmem>>, %arg3: memref<256x512xbf16, #tpu.memory_space<vmem>>, %arg4: memref<1x512xf32, #tpu.memory_space<vmem>>, %arg5: memref<512x256xbf16, #tpu.memory_space<vmem>>, %arg6: memref<3x256xf32, #tpu.memory_space<vmem>>, %arg7: memref<16x256xf32, #tpu.memory_space<vmem>>, %arg8: memref<16x256xf32, #tpu.memory_space<vmem>>) attributes {dimension_semantics = [#tpu.dimension_semantics<parallel>, #tpu.dimension_semantics<arbitrary>], iteration_bounds = array<i64: 1, 1>, scalar_prefetch = 0 : i64, scratch_operands = 1 : i64, tpu.core_type = #tpu.core_type<tc>, window_params = [{transform_indices = @transform_0, window_bounds = array<i64: 16, 256>}, {transform_indices = @transform_1, window_bounds = array<i64: 256, 512>}, {transform_indices = @transform_2, window_bounds = array<i64: 1, 512>}, {transform_indices = @transform_3, window_bounds = array<i64: 512, 256>}, {pipeline_mode = #tpu.pipeline_mode<synchronous>, transform_indices = @transform_4, window_bounds = array<i64: 3, 256>}, {transform_indices = @transform_5, window_bounds = array<i64: 16, 256>}]} {
    %c0_i32 = arith.constant 0 : i32
    %0 = arith.cmpi eq, %arg1, %c0_i32 : i32
    %1 = arith.extui %0 : i1 to i32
    %c0_i32_0 = arith.constant 0 : i32
    %2 = arith.cmpi ne, %1, %c0_i32_0 : i32
    scf.if %2 {
      %cst_16 = arith.constant 0.000000e+00 : f32
      %21 = vector.broadcast %cst_16 : f32 to vector<16x256xf32>
      %c0_17 = arith.constant 0 : index
      %c0_18 = arith.constant 0 : index
      %22 = vector.load %arg8[%c0_17, %c0_18] : memref<16x256xf32, #tpu.memory_space<vmem>>, vector<16x256xf32>
      tpu.vector_store %arg8[%c0_17, %c0_18], %21 {strides = array<i32>} : memref<16x256xf32, #tpu.memory_space<vmem>>, vector<16x256xf32>,
    } else {
    }
    %c0 = arith.constant 0 : index
    %c0_1 = arith.constant 0 : index
    %3 = vector.load %arg2[%c0, %c0_1] : memref<16x256xf32, #tpu.memory_space<vmem>>, vector<16x256xf32>
    %4 = arith.truncf %3 : vector<16x256xf32> to vector<16x256xbf16>
    %c0_2 = arith.constant 0 : index
    %c0_3 = arith.constant 0 : index
    %5 = vector.load %arg3[%c0_2, %c0_3] : memref<256x512xbf16, #tpu.memory_space<vmem>>, vector<256x512xbf16>
    %cst = arith.constant dense<0.000000e+00> : vector<16x512xf32>
    %6 = tpu.matmul %4, %5, %cst {dimension_numbers = #tpu.dot_dimension_numbers<[1], [0], [0], [1], [0, 0, 1, 1], [], []>} : vector<16x256xbf16>, vector<256x512xbf16>, vector<16x512xf32> -> vector<16x512xf32>
    %c0_4 = arith.constant 0 : index
    %c0_5 = arith.constant 0 : index
    %7 = vector.load %arg4[%c0_4, %c0_5] : memref<1x512xf32, #tpu.memory_space<vmem>>, vector<1x512xf32>
    %8 = vector.broadcast %7 : vector<1x512xf32> to vector<16x512xf32>
    %9 = arith.addf %6, %8 : vector<16x512xf32>
    %cst_6 = arith.constant 0.000000e+00 : f32
    %10 = vector.broadcast %cst_6 : f32 to vector<16x512xf32>
    %11 = arith.maximumf %9, %10 : vector<16x512xf32>
    %c0_7 = arith.constant 0 : index
    %c0_8 = arith.constant 0 : index
    %12 = vector.load %arg8[%c0_7, %c0_8] : memref<16x256xf32, #tpu.memory_space<vmem>>, vector<16x256xf32>
    %13 = arith.truncf %11 : vector<16x512xf32> to vector<16x512xbf16>
    %c0_9 = arith.constant 0 : index
    %c0_10 = arith.constant 0 : index
    %14 = vector.load %arg5[%c0_9, %c0_10] : memref<512x256xbf16, #tpu.memory_space<vmem>>, vector<512x256xbf16>
    %cst_11 = arith.constant dense<0.000000e+00> : vector<16x256xf32>
    %15 = tpu.matmul %13, %14, %cst_11 {dimension_numbers = #tpu.dot_dimension_numbers<[1], [0], [0], [1], [0, 0, 1, 1], [], []>} : vector<16x512xbf16>, vector<512x256xbf16>, vector<16x256xf32> -> vector<16x256xf32>
    %16 = arith.addf %12, %15 : vector<16x256xf32>
    %c0_12 = arith.constant 0 : index
    %c0_13 = arith.constant 0 : index
    %17 = vector.load %arg8[%c0_12, %c0_13] : memref<16x256xf32, #tpu.memory_space<vmem>>, vector<16x256xf32>
    tpu.vector_store %arg8[%c0_12, %c0_13], %16 {strides = array<i32>} : memref<16x256xf32, #tpu.memory_space<vmem>>, vector<16x256xf32>,
    %c0_i32_14 = arith.constant 0 : i32
    %18 = arith.cmpi eq, %arg1, %c0_i32_14 : i32
    %19 = arith.extui %18 : i1 to i32
    %c0_i32_15 = arith.constant 0 : i32
    %20 = arith.cmpi ne, %19, %c0_i32_15 : i32
    scf.if %20 {
      %c0_16 = arith.constant 0 : index
      %c0_17 = arith.constant 0 : index
      %21 = vector.load %arg6[%c0_16, %c0_17] : memref<3x256xf32, #tpu.memory_space<vmem>>, vector<3x256xf32>
      %22 = vector.extract_strided_slice %21 {offsets = [0, 0], sizes = [1, 256], strides = [1, 1]} : vector<3x256xf32> to vector<1x256xf32>
      %23 = vector.extract_strided_slice %21 {offsets = [1, 0], sizes = [1, 256], strides = [1, 1]} : vector<3x256xf32> to vector<1x256xf32>
      %24 = vector.extract_strided_slice %21 {offsets = [2, 0], sizes = [1, 256], strides = [1, 1]} : vector<3x256xf32> to vector<1x256xf32>
      %c0_18 = arith.constant 0 : index
      %c0_19 = arith.constant 0 : index
      %25 = vector.load %arg8[%c0_18, %c0_19] : memref<16x256xf32, #tpu.memory_space<vmem>>, vector<16x256xf32>
      %26 = vector.broadcast %22 : vector<1x256xf32> to vector<16x256xf32>
      %27 = arith.addf %25, %26 : vector<16x256xf32>
      %28 = arith.addf %27, %3 : vector<16x256xf32>
      %cst_20 = arith.constant dense<0.000000e+00> : vector<16xf32>
      %29 = vector.multi_reduction <add>, %28, %cst_20 [1] : vector<16x256xf32> to vector<16xf32>
      %30 = vector.shape_cast %29 : vector<16xf32> to vector<16x1xf32>
      %cst_21 = arith.constant 2.560000e+02 : f32
      %31 = vector.broadcast %cst_21 : f32 to vector<16x1xf32>
      %32 = arith.divf %30, %31 : vector<16x1xf32>
      %33 = vector.broadcast %32 : vector<16x1xf32> to vector<16x256xf32>
      %34 = arith.subf %28, %33 : vector<16x256xf32>
      %35 = arith.mulf %34, %34 : vector<16x256xf32>
      %cst_22 = arith.constant dense<0.000000e+00> : vector<16xf32>
      %36 = vector.multi_reduction <add>, %35, %cst_22 [1] : vector<16x256xf32> to vector<16xf32>
      %37 = vector.shape_cast %36 : vector<16xf32> to vector<16x1xf32>
      %cst_23 = arith.constant 2.560000e+02 : f32
      %38 = vector.broadcast %cst_23 : f32 to vector<16x1xf32>
      %39 = arith.divf %37, %38 : vector<16x1xf32>
      %cst_24 = arith.constant 9.99999997E-7 : f32
      %40 = vector.broadcast %cst_24 : f32 to vector<16x1xf32>
      %41 = arith.addf %39, %40 : vector<16x1xf32>
      %42 = math.rsqrt %41 : vector<16x1xf32>
      %43 = vector.broadcast %42 : vector<16x1xf32> to vector<16x256xf32>
      %44 = arith.mulf %34, %43 : vector<16x256xf32>
      %45 = vector.broadcast %23 : vector<1x256xf32> to vector<16x256xf32>
      %46 = arith.mulf %44, %45 : vector<16x256xf32>
      %47 = vector.broadcast %24 : vector<1x256xf32> to vector<16x256xf32>
      %48 = arith.addf %46, %47 : vector<16x256xf32>
      %c0_25 = arith.constant 0 : index
      %c0_26 = arith.constant 0 : index
      %49 = vector.load %arg7[%c0_25, %c0_26] : memref<16x256xf32, #tpu.memory_space<vmem>>, vector<16x256xf32>
      tpu.vector_store %arg7[%c0_25, %c0_26], %48 {strides = array<i32>} : memref<16x256xf32, #tpu.memory_space<vmem>>, vector<16x256xf32>,
    } else {
    }
    return
  }
  func.func @transform_0(%arg0: i32, %arg1: i32) -> (i32, i32) {
    %c0_i32 = arith.constant 0 : i32
    %c0_i32_0 = arith.constant 0 : i32
    return %arg0, %c0_i32 : i32, i32
  }
  func.func @transform_1(%arg0: i32, %arg1: i32) -> (i32, i32) {
    %c0_i32 = arith.constant 0 : i32
    %c0_i32_0 = arith.constant 0 : i32
    return %c0_i32, %arg1 : i32, i32
  }
  func.func @transform_2(%arg0: i32, %arg1: i32) -> (i32, i32) {
    %c0_i32 = arith.constant 0 : i32
    %c0_i32_0 = arith.constant 0 : i32
    return %c0_i32, %arg1 : i32, i32
  }
  func.func @transform_3(%arg0: i32, %arg1: i32) -> (i32, i32) {
    %c0_i32 = arith.constant 0 : i32
    %c0_i32_0 = arith.constant 0 : i32
    return %arg1, %c0_i32 : i32, i32
  }
  func.func @transform_4(%arg0: i32, %arg1: i32) -> (i32, i32) {
    %c0_i32 = arith.constant 0 : i32
    %c0_i32_0 = arith.constant 0 : i32
    %c0_i32_1 = arith.constant 0 : i32
    return %c0_i32, %c0_i32_0 : i32, i32
  }
  func.func @transform_5(%arg0: i32, %arg1: i32) -> (i32, i32) {
    %c0_i32 = arith.constant 0 : i32
    %c0_i32_0 = arith.constant 0 : i32
    return %arg0, %c0_i32 : i32, i32
  }
}

</mosaic_0001>

<llo_original>
// kernel: tpu_custom_call.1
$region0: #{tpu_custom_call.1}
  #allocation0 [shape = 'u32[]', space=smem, size = 0x4, offset = 0x4, fixed_abs, tag = 'smem constant byte address 0x4 - core index']
  #allocation1 [shape = 'u32[144,128]{1,0:T(1,128)}', space=vmem, size = 0x12000, scoped, tag = 'internal scratch']
  #allocation2 [shape = 'f32[16,256]{1,0:T(8,128)}', space=vmem, size = 0x4000, scoped, tag = 'scratch operand']
  %s0 = inlined_call_operand.hbm [shape: f32[16,256], index: 0, kind: input, shape index: {}]
  %s1 = inlined_call_operand.hbm [shape: bf16[256,512], index: 1, kind: input, shape index: {}]
  %s2 = inlined_call_operand.hbm [shape: f32[1,512], index: 2, kind: input, shape index: {}]
  %s3 = inlined_call_operand.hbm [shape: bf16[512,256], index: 3, kind: input, shape index: {}]
  %s4 = inlined_call_operand.hbm [shape: f32[3,256], index: 4, kind: input, shape index: {}]
  %s5 = inlined_call_operand.hbm [shape: f32[16,256], index: 5, kind: output, shape index: {}]
  %s6 = sld [smem:[#allocation0]]
  $region58: #{tpu_custom_call.1} parent=0
    _
  %s8 = ssub.s32 1, %s6
  %s9 = scalar_select 0, %s8, %s6
  $region1: #{tpu_custom_call.1} parent=0
    #allocation3 [shape = 'u8[16384]{0}', space=vmem, size = 0x4000, scoped, tag = 'input window, operand 0, single buffered']
    #allocation4 [shape = 's32[1]{0}', space=sflag, size = 0x4, scoped, tag = 'scoped memory for tpu_custom_call.1']
    #allocation5 [shape = 's32[1]{0}', space=sflag, size = 0x4, scoped, tag = 'scoped memory for tpu_custom_call.1']
    #allocation6 [shape = 'u8[262144]{0}', space=vmem, size = 0x40000, scoped, tag = 'input window, operand 1, single buffered']
    #allocation7 [shape = 's32[1]{0}', space=sflag, size = 0x4, scoped, tag = 'scoped memory for tpu_custom_call.1']
    #allocation8 [shape = 'u8[2048]{0}', space=vmem, size = 0x800, scoped, tag = 'input window, operand 2, single buffered']
    #allocation9 [shape = 'u8[262144]{0}', space=vmem, size = 0x40000, scoped, tag = 'input window, operand 3, single buffered']
    #allocation10 [shape = 's32[1]{0}', space=sflag, size = 0x4, scoped, tag = 'scoped memory for tpu_custom_call.1']
    #allocation11 [shape = 'u8[4096]{0}', space=vmem, size = 0x1000, scoped, tag = 'input window, operand 4, single buffered']
    #allocation12 [shape = 'u8[16384]{0}', space=vmem, size = 0x4000, scoped, tag = 'output window, operand 0, single buffered']
    %10 = vsyncpa [#allocation4], 0
    %11 = vsyncpa [#allocation7], 0
    %12 = vsyncpa [#allocation10], 0
    %13 = vsyncpa [#allocation5], 0
    // Predicated region
    $region2: #{tpu_custom_call.1} parent=1 // pred_check
      _
    $region3: #{tpu_custom_call.1} parent=1 // pred_check_branch
      %15 = sbr.rel (0) target = $region5
    $region4: #{tpu_custom_call.1} parent=1 // pred_region
      %s17 = ssub.s32 512, 512
      %18 = vsyncadd [#allocation4], %s17
      %s19 = sshll.u32 [#allocation3], 4
      %s20 = int_to_ptr.vmem [resolvable:$true] %s19
      %25 = dma.hbm_to_vmem [thread:$0]  %s0, 512, %s20, [#allocation4], 256, 256, 16
    $region5: #{tpu_custom_call.1} parent=1 // pred_fallthru
      _
    // Predicated region
    $region6: #{tpu_custom_call.1} parent=1 // pred_check
      _
    $region7: #{tpu_custom_call.1} parent=1 // pred_check_branch
      %27 = sbr.rel (0) target = $region9
    $region8: #{tpu_custom_call.1} parent=1 // pred_region
      %s29 = ssub.s32 8192, 8192
      %30 = vsyncadd [#allocation7], %s29
      %s31 = sshll.u32 [#allocation6], 4
      %s32 = int_to_ptr.vmem [resolvable:$true] %s31
      %37 = dma.hbm_to_vmem [thread:$0]  %s1, 8192, %s32, [#allocation7], 256, 256, 16
    $region9: #{tpu_custom_call.1} parent=1 // pred_fallthru
      _
    // Predicated region
    $region10: #{tpu_custom_call.1} parent=1 // pred_check
      _
    $region11: #{tpu_custom_call.1} parent=1 // pred_check_branch
      %39 = sbr.rel (0) target = $region13
    $region12: #{tpu_custom_call.1} parent=1 // pred_region
      %s41 = ssub.s32 64, 64
      %42 = vsyncadd [#allocation7], %s41
      %s44 = sshll.u32 [#allocation8], 4
      %s45 = int_to_ptr.vmem [resolvable:$true] %s44
      %47 = dma.hbm_to_vmem [thread:$0]  %s2, 64, %s45, [#allocation7]
    $region13: #{tpu_custom_call.1} parent=1 // pred_fallthru
      _
    // Predicated region
    $region14: #{tpu_custom_call.1} parent=1 // pred_check
      _
    $region15: #{tpu_custom_call.1} parent=1 // pred_check_branch
      %49 = sbr.rel (0) target = $region17
    $region16: #{tpu_custom_call.1} parent=1 // pred_region
      %s51 = ssub.s32 8192, 8192
      %52 = vsyncadd [#allocation10], %s51
      %s53 = sshll.u32 [#allocation9], 4
      %s54 = int_to_ptr.vmem [resolvable:$true] %s53
      %59 = dma.hbm_to_vmem [thread:$0]  %s3, 8192, %s54, [#allocation10], 128, 128, 8
    $region17: #{tpu_custom_call.1} parent=1 // pred_fallthru
      _
    // Predicated region
    $region18: #{tpu_custom_call.1} parent=1 // pred_check
      _
    $region19: #{tpu_custom_call.1} parent=1 // pred_check_branch
      %61 = sbr.rel (0) target = $region21
    $region20: #{tpu_custom_call.1} parent=1 // pred_region
      %s63 = ssub.s32 128, 128
      %64 = vsyncadd [#allocation10], %s63
      %s66 = sshll.u32 [#allocation11], 4
      %s67 = int_to_ptr.vmem [resolvable:$true] %s66
      %69 = dma.hbm_to_vmem [thread:$0]  %s4, 128, %s67, [#allocation10]
    $region21: #{tpu_custom_call.1} parent=1 // pred_fallthru
      _
    // Predicated region
    $region22: #{tpu_custom_call.1} parent=1 // pred_check
      _
    $region23: #{tpu_custom_call.1} parent=1 // pred_check_branch
      %71 = sbr.rel (0) target = $region25
    $region24: #{tpu_custom_call.1} parent=1 // pred_region
      %72 = dma.done [#allocation4], 512
    $region25: #{tpu_custom_call.1} parent=1 // pred_fallthru
      _
    // Predicated region
    $region26: #{tpu_custom_call.1} parent=1 // pred_check
      _
    $region27: #{tpu_custom_call.1} parent=1 // pred_check_branch
      %74 = sbr.rel (0) target = $region29
    $region28: #{tpu_custom_call.1} parent=1 // pred_region
      %75 = dma.done [#allocation7], 8192
    $region29: #{tpu_custom_call.1} parent=1 // pred_fallthru
      _
    // Predicated region
    $region30: #{tpu_custom_call.1} parent=1 // pred_check
      _
    $region31: #{tpu_custom_call.1} parent=1 // pred_check_branch
      %77 = sbr.rel (0) target = $region33
    $region32: #{tpu_custom_call.1} parent=1 // pred_region
      %78 = dma.done [#allocation7], 64
    $region33: #{tpu_custom_call.1} parent=1 // pred_fallthru
      _
    // Predicated region
    $region34: #{tpu_custom_call.1} parent=1 // pred_check
      _
    $region35: #{tpu_custom_call.1} parent=1 // pred_check_branch
      %80 = sbr.rel (0) target = $region37
    $region36: #{tpu_custom_call.1} parent=1 // pred_region
      %81 = dma.done [#allocation10], 8192
    $region37: #{tpu_custom_call.1} parent=1 // pred_fallthru
      _
    // Predicated region
    $region38: #{tpu_custom_call.1} parent=1 // pred_check
      _
    $region39: #{tpu_custom_call.1} parent=1 // pred_check_branch
      %83 = sbr.rel (0) target = $region41
    $region40: #{tpu_custom_call.1} parent=1 // pred_region
      %84 = dma.done [#allocation10], 128
    $region41: #{tpu_custom_call.1} parent=1 // pred_fallthru
      _
    %p85 = scmp.eq.s32.totalorder 0, 0
    // Predicated region
    $region42: #{tpu_custom_call.1} parent=1 // pred_check
      %p86 = pneg %p85
    $region43: #{tpu_custom_call.1} parent=1 // pred_check_branch
      %88 = sbr.rel (%p86) target = $region45
    $region44: #{tpu_custom_call.1} parent=1 // pred_region
      %89 = vst [vmem:[#allocation2] sm:$0xff] 0.0
      %90 = vst [vmem:[#allocation2 + $0x8] sm:$0xff] 0.0
      %91 = vst [vmem:[#allocation2 + $0x10] sm:$0xff] 0.0
      %92 = vst [vmem:[#allocation2 + $0x18] sm:$0xff] 0.0
    $region45: #{tpu_custom_call.1} parent=1 // pred_fallthru
      _
    %v93 = vld [vmem:[#allocation3] sm:$0xff]
    %v94 = vld [vmem:[#allocation3 + $0x8] sm:$0xff]
    %v95 = vld [vmem:[#allocation3 + $0x10] sm:$0xff]
    %v96 = vld [vmem:[#allocation3 + $0x18] sm:$0xff]
    %v97 = vpack.c.bf16 %v95, %v93
    %v98 = vpack.c.bf16 %v96, %v94
    %v99 = vld [vmem:[#allocation6] sm:$0xff]
    %v100 = vld [vmem:[#allocation6 + $0x8] sm:$0xff]
    %v101 = vld [vmem:[#allocation6 + $0x10] sm:$0xff]
    %v102 = vld [vmem:[#allocation6 + $0x18] sm:$0xff]
    %v103 = vld [vmem:[#allocation6 + $0x20] sm:$0xff]
    %v104 = vld [vmem:[#allocation6 + $0x28] sm:$0xff]
    %v105 = vld [vmem:[#allocation6 + $0x30] sm:$0xff]
    %v106 = vld [vmem:[#allocation6 + $0x38] sm:$0xff]
    %v107 = vld [vmem:[#allocation6 + $0x40] sm:$0xff]
    %v108 = vld [vmem:[#allocation6 + $0x48] sm:$0xff]
    %v109 = vld [vmem:[#allocation6 + $0x50] sm:$0xff]
    %v110 = vld [vmem:[#allocation6 + $0x58] sm:$0xff]
    %v111 = vld [vmem:[#allocation6 + $0x60] sm:$0xff]
    %v112 = vld [vmem:[#allocation6 + $0x68] sm:$0xff]
    %v113 = vld [vmem:[#allocation6 + $0x70] sm:$0xff]
    %v114 = vld [vmem:[#allocation6 + $0x78] sm:$0xff]
    %v115 = vld [vmem:[#allocation6 + $0x80] sm:$0xff]
    %v116 = vld [vmem:[#allocation6 + $0x88] sm:$0xff]
    %v117 = vld [vmem:[#allocation6 + $0x90] sm:$0xff]
    %v118 = vld [vmem:[#allocation6 + $0x98] sm:$0xff]
    %v119 = vld [vmem:[#allocation6 + $0xa0] sm:$0xff]
    %v120 = vld [vmem:[#allocation6 + $0xa8] sm:$0xff]
    %v121 = vld [vmem:[#allocation6 + $0xb0] sm:$0xff]
    %v122 = vld [vmem:[#allocation6 + $0xb8] sm:$0xff]
    %v123 = vld [vmem:[#allocation6 + $0xc0] sm:$0xff]
    %v124 = vld [vmem:[#allocation6 + $0xc8] sm:$0xff]
    %v125 = vld [vmem:[#allocation6 + $0xd0] sm:$0xff]
    %v126 = vld [vmem:[#allocation6 + $0xd8] sm:$0xff]
    %v127 = vld [vmem:[#allocation6 + $0xe0] sm:$0xff]
    %v128 = vld [vmem:[#allocation6 + $0xe8] sm:$0xff]
    %v129 = vld [vmem:[#allocation6 + $0xf0] sm:$0xff]
    %v130 = vld [vmem:[#allocation6 + $0xf8] sm:$0xff]
    %v131 = vld [vmem:[#allocation6 + $0x100] sm:$0xff]
    %v132 = vld [vmem:[#allocation6 + $0x108] sm:$0xff]
    %v133 = vld [vmem:[#allocation6 + $0x110] sm:$0xff]
    %v134 = vld [vmem:[#allocation6 + $0x118] sm:$0xff]
    %v135 = vld [vmem:[#allocation6 + $0x120] sm:$0xff]
    %v136 = vld [vmem:[#allocation6 + $0x128] sm:$0xff]
    %v137 = vld [vmem:[#allocation6 + $0x130] sm:$0xff]
    %v138 = vld [vmem:[#allocation6 + $0x138] sm:$0xff]
    %v139 = vld [vmem:[#allocation6 + $0x140] sm:$0xff]
    %v140 = vld [vmem:[#allocation6 + $0x148] sm:$0xff]
    %v141 = vld [vmem:[#allocation6 + $0x150] sm:$0xff]
    %v142 = vld [vmem:[#allocation6 + $0x158] sm:$0xff]
    %v143 = vld [vmem:[#allocation6 + $0x160] sm:$0xff]
    %v144 = vld [vmem:[#allocation6 + $0x168] sm:$0xff]
    %v145 = vld [vmem:[#allocation6 + $0x170] sm:$0xff]
    %v146 = vld [vmem:[#allocation6 + $0x178] sm:$0xff]
    %v147 = vld [vmem:[#allocation6 + $0x180] sm:$0xff]
    %v148 = vld [vmem:[#allocation6 + $0x188] sm:$0xff]
    %v149 = vld [vmem:[#allocation6 + $0x190] sm:$0xff]
    %v150 = vld [vmem:[#allocation6 + $0x198] sm:$0xff]
    %v151 = vld [vmem:[#allocation6 + $0x1a0] sm:$0xff]
    %v152 = vld [vmem:[#allocation6 + $0x1a8] sm:$0xff]
    %v153 = vld [vmem:[#allocation6 + $0x1b0] sm:$0xff]
    %v154 = vld [vmem:[#allocation6 + $0x1b8] sm:$0xff]
    %v155 = vld [vmem:[#allocation6 + $0x1c0] sm:$0xff]
    %v156 = vld [vmem:[#allocation6 + $0x1c8] sm:$0xff]
    %v157 = vld [vmem:[#allocation6 + $0x1d0] sm:$0xff]
    %v158 = vld [vmem:[#allocation6 + $0x1d8] sm:$0xff]
    %v159 = vld [vmem:[#allocation6 + $0x1e0] sm:$0xff]
    %v160 = vld [vmem:[#allocation6 + $0x1e8] sm:$0xff]
    %v161 = vld [vmem:[#allocation6 + $0x1f0] sm:$0xff]
    %v162 = vld [vmem:[#allocation6 + $0x1f8] sm:$0xff]
    %v163 = vld [vmem:[#allocation8] sm:$0xf]
    %v165 = vlaneseq
    %v166 = vshrl.u32 %v165, 7
    %v167 = vsub.s32 0, %v166
    %v168 = vrot.slane %v163, %v167
    %v169 = vlaneseq
    %v170 = vshrl.u32 %v169, 7
    %v171 = vsub.s32 1, %v170
    %v172 = vrot.slane %v163, %v171
    %v173 = vlaneseq
    %v174 = vshrl.u32 %v173, 7
    %v175 = vsub.s32 2, %v174
    %v176 = vrot.slane %v163, %v175
    %v177 = vlaneseq
    %v178 = vshrl.u32 %v177, 7
    %v179 = vsub.s32 3, %v178
    %v180 = vrot.slane %v163, %v179
    %v249 = vunpack.c.l.b16 %v99
    %v250 = vunpack.c.h.b16 %v99
    %v251 = vunpack.c.l.b16 %v100
    %v252 = vunpack.c.h.b16 %v100
    %v253 = vunpack.c.l.b16 %v101
    %v254 = vunpack.c.h.b16 %v101
    %v255 = vunpack.c.l.b16 %v102
    %v256 = vunpack.c.h.b16 %v102
    %v257 = vunpack.c.l.b16 %v103
    %v258 = vunpack.c.h.b16 %v103
    %v259 = vunpack.c.l.b16 %v104
    %v260 = vunpack.c.h.b16 %v104
    %v261 = vunpack.c.l.b16 %v105
    %v262 = vunpack.c.h.b16 %v105
    %v263 = vunpack.c.l.b16 %v106
    %v264 = vunpack.c.h.b16 %v106
    %v265 = vunpack.c.l.b16 %v107
    %v266 = vunpack.c.h.b16 %v107
    %v267 = vunpack.c.l.b16 %v108
    %v268 = vunpack.c.h.b16 %v108
    %v269 = vunpack.c.l.b16 %v109
    %v270 = vunpack.c.h.b16 %v109
    %v271 = vunpack.c.l.b16 %v110
    %v272 = vunpack.c.h.b16 %v110
    %v273 = vunpack.c.l.b16 %v111
    %v274 = vunpack.c.h.b16 %v111
    %v275 = vunpack.c.l.b16 %v112
    %v276 = vunpack.c.h.b16 %v112
    %v277 = vunpack.c.l.b16 %v113
    %v278 = vunpack.c.h.b16 %v113
    %v279 = vunpack.c.l.b16 %v114
    %v280 = vunpack.c.h.b16 %v114
    %v281 = vunpack.c.l.b16 %v115
    %v282 = vunpack.c.h.b16 %v115
    %v283 = vunpack.c.l.b16 %v116
    %v284 = vunpack.c.h.b16 %v116
    %v285 = vunpack.c.l.b16 %v117
    %v286 = vunpack.c.h.b16 %v117
    %v287 = vunpack.c.l.b16 %v118
    %v288 = vunpack.c.h.b16 %v118
    %v289 = vunpack.c.l.b16 %v119
    %v290 = vunpack.c.h.b16 %v119
    %v291 = vunpack.c.l.b16 %v120
    %v292 = vunpack.c.h.b16 %v120
    %v293 = vunpack.c.l.b16 %v121
    %v294 = vunpack.c.h.b16 %v121
    %v295 = vunpack.c.l.b16 %v122
    %v296 = vunpack.c.h.b16 %v122
    %v297 = vunpack.c.l.b16 %v123
    %v298 = vunpack.c.h.b16 %v123
    %v299 = vunpack.c.l.b16 %v124
    %v300 = vunpack.c.h.b16 %v124
    %v301 = vunpack.c.l.b16 %v125
    %v302 = vunpack.c.h.b16 %v125
    %v303 = vunpack.c.l.b16 %v126
    %v304 = vunpack.c.h.b16 %v126
    %v305 = vunpack.c.l.b16 %v127
    %v306 = vunpack.c.h.b16 %v127
    %v307 = vunpack.c.l.b16 %v128
    %v308 = vunpack.c.h.b16 %v128
    %v309 = vunpack.c.l.b16 %v129
    %v310 = vunpack.c.h.b16 %v129
    %v311 = vunpack.c.l.b16 %v130
    %v312 = vunpack.c.h.b16 %v130
    %v313 = vunpack.c.l.b16 %v131
    %v314 = vunpack.c.h.b16 %v131
    %v315 = vunpack.c.l.b16 %v132
    %v316 = vunpack.c.h.b16 %v132
    %v317 = vunpack.c.l.b16 %v133
    %v318 = vunpack.c.h.b16 %v133
    %v319 = vunpack.c.l.b16 %v134
    %v320 = vunpack.c.h.b16 %v134
    %v321 = vunpack.c.l.b16 %v135
    %v322 = vunpack.c.h.b16 %v135
    %v323 = vunpack.c.l.b16 %v136
    %v324 = vunpack.c.h.b16 %v136
    %v325 = vunpack.c.l.b16 %v137
    %v326 = vunpack.c.h.b16 %v137
    %v327 = vunpack.c.l.b16 %v138
    %v328 = vunpack.c.h.b16 %v138
    %v329 = vunpack.c.l.b16 %v139
    %v330 = vunpack.c.h.b16 %v139
    %v331 = vunpack.c.l.b16 %v140
    %v332 = vunpack.c.h.b16 %v140
    %v333 = vunpack.c.l.b16 %v141
    %v334 = vunpack.c.h.b16 %v141
    %v335 = vunpack.c.l.b16 %v142
    %v336 = vunpack.c.h.b16 %v142
    %v337 = vunpack.c.l.b16 %v143
    %v338 = vunpack.c.h.b16 %v143
    %v339 = vunpack.c.l.b16 %v144
    %v340 = vunpack.c.h.b16 %v144
    %v341 = vunpack.c.l.b16 %v145
    %v342 = vunpack.c.h.b16 %v145
    %v343 = vunpack.c.l.b16 %v146
    %v344 = vunpack.c.h.b16 %v146
    %v345 = vunpack.c.l.b16 %v147
    %v346 = vunpack.c.h.b16 %v147
    %v347 = vunpack.c.l.b16 %v148
    %v348 = vunpack.c.h.b16 %v148
    %v349 = vunpack.c.l.b16 %v149
    %v350 = vunpack.c.h.b16 %v149
    %v351 = vunpack.c.l.b16 %v150
    %v352 = vunpack.c.h.b16 %v150
    %v353 = vunpack.c.l.b16 %v151
    %v354 = vunpack.c.h.b16 %v151
    %v355 = vunpack.c.l.b16 %v152
    %v356 = vunpack.c.h.b16 %v152
    %v357 = vunpack.c.l.b16 %v153
    %v358 = vunpack.c.h.b16 %v153
    %v359 = vunpack.c.l.b16 %v154
    %v360 = vunpack.c.h.b16 %v154
    %v361 = vunpack.c.l.b16 %v155
    %v362 = vunpack.c.h.b16 %v155
    %v363 = vunpack.c.l.b16 %v156
    %v364 = vunpack.c.h.b16 %v156
    %v365 = vunpack.c.l.b16 %v157
    %v366 = vunpack.c.h.b16 %v157
    %v367 = vunpack.c.l.b16 %v158
    %v368 = vunpack.c.h.b16 %v158
    %v369 = vunpack.c.l.b16 %v159
    %v370 = vunpack.c.h.b16 %v159
    %v371 = vunpack.c.l.b16 %v160
    %v372 = vunpack.c.h.b16 %v160
    %v373 = vunpack.c.l.b16 %v161
    %v374 = vunpack.c.h.b16 %v161
    %v375 = vunpack.c.l.b16 %v162
    %v376 = vunpack.c.h.b16 %v162
    %v377 = vpack.c.b16 %v253, %v249
    %v378 = vpack.c.b16 %v254, %v250
    %v379 = vpack.c.b16 %v255, %v251
    %v380 = vpack.c.b16 %v256, %v252
    %v381 = vpack.c.b16 %v261, %v257
    %v382 = vpack.c.b16 %v262, %v258
    %v383 = vpack.c.b16 %v263, %v259
    %v384 = vpack.c.b16 %v264, %v260
    %v385 = vpack.c.b16 %v269, %v265
    %v386 = vpack.c.b16 %v270, %v266
    %v387 = vpack.c.b16 %v271, %v267
    %v388 = vpack.c.b16 %v272, %v268
    %v389 = vpack.c.b16 %v277, %v273
    %v390 = vpack.c.b16 %v278, %v274
    %v391 = vpack.c.b16 %v279, %v275
    %v392 = vpack.c.b16 %v280, %v276
    %v393 = vpack.c.b16 %v285, %v281
    %v394 = vpack.c.b16 %v286, %v282
    %v395 = vpack.c.b16 %v287, %v283
    %v396 = vpack.c.b16 %v288, %v284
    %v397 = vpack.c.b16 %v293, %v289
    %v398 = vpack.c.b16 %v294, %v290
    %v399 = vpack.c.b16 %v295, %v291
    %v400 = vpack.c.b16 %v296, %v292
    %v401 = vpack.c.b16 %v301, %v297
    %v402 = vpack.c.b16 %v302, %v298
    %v403 = vpack.c.b16 %v303, %v299
    %v404 = vpack.c.b16 %v304, %v300
    %v405 = vpack.c.b16 %v309, %v305
    %v406 = vpack.c.b16 %v310, %v306
    %v407 = vpack.c.b16 %v311, %v307
    %v408 = vpack.c.b16 %v312, %v308
    %v409 = vpack.c.b16 %v317, %v313
    %v410 = vpack.c.b16 %v318, %v314
    %v411 = vpack.c.b16 %v319, %v315
    %v412 = vpack.c.b16 %v320, %v316
    %v413 = vpack.c.b16 %v325, %v321
    %v414 = vpack.c.b16 %v326, %v322
    %v415 = vpack.c.b16 %v327, %v323
    %v416 = vpack.c.b16 %v328, %v324
    %v417 = vpack.c.b16 %v333, %v329
    %v418 = vpack.c.b16 %v334, %v330
    %v419 = vpack.c.b16 %v335, %v331
    %v420 = vpack.c.b16 %v336, %v332
    %v421 = vpack.c.b16 %v341, %v337
    %v422 = vpack.c.b16 %v342, %v338
    %v423 = vpack.c.b16 %v343, %v339
    %v424 = vpack.c.b16 %v344, %v340
    %v425 = vpack.c.b16 %v349, %v345
    %v426 = vpack.c.b16 %v350, %v346
    %v427 = vpack.c.b16 %v351, %v347
    %v428 = vpack.c.b16 %v352, %v348
    %v429 = vpack.c.b16 %v357, %v353
    %v430 = vpack.c.b16 %v358, %v354
    %v431 = vpack.c.b16 %v359, %v355
    %v432 = vpack.c.b16 %v360, %v356
    %v433 = vpack.c.b16 %v365, %v361
    %v434 = vpack.c.b16 %v366, %v362
    %v435 = vpack.c.b16 %v367, %v363
    %v436 = vpack.c.b16 %v368, %v364
    %v437 = vpack.c.b16 %v373, %v369
    %v438 = vpack.c.b16 %v374, %v370
    %v439 = vpack.c.b16 %v375, %v371
    %v440 = vpack.c.b16 %v376, %v372
    %505 = vmatprep.subr.bf16.mxu0 %v406
    %506 = vmatpush1.bf16.msra.mxu0 %v405
    %507 = vmatprep.subr.bf16.mxu0 %v402
    %508 = vmatpush1.bf16.msra.mxu0 %v401
    %509 = vmatprep.subr.bf16.mxu0 %v398
    %510 = vmatpush1.bf16.msra.mxu0 %v397
    %511 = vmatprep.subr.bf16.mxu0 %v394
    %512 = vmatpush1.bf16.msra.mxu0 %v393
    %513 = vmatprep.subr.bf16.mxu0 %v390
    %514 = vmatpush1.bf16.msra.mxu0 %v389
    %515 = vmatprep.subr.bf16.mxu0 %v386
    %516 = vmatpush1.bf16.msra.mxu0 %v385
    %517 = vmatprep.subr.bf16.mxu0 %v382
    %518 = vmatpush1.bf16.msra.mxu0 %v381
    %519 = vmatprep.subr.bf16.mxu0 %v378
    %520 = vmatpush1.bf16.msra.mxu0 %v377
    %521 = vmatprep.subr.bf16.mxu0 %v438
    %522 = vmatpush2.bf16.msra.mxu0 %v437
    %523 = vmatprep.subr.bf16.mxu0 %v434
    %524 = vmatpush2.bf16.msra.mxu0 %v433
    %525 = vmatprep.subr.bf16.mxu0 %v430
    %526 = vmatpush2.bf16.msra.mxu0 %v429
    %527 = vmatprep.subr.bf16.mxu0 %v426
    %528 = vmatpush2.bf16.msra.mxu0 %v425
    %529 = vmatprep.subr.bf16.mxu0 %v422
    %530 = vmatpush2.bf16.msra.mxu0 %v421
    %531 = vmatprep.subr.bf16.mxu0 %v418
    %532 = vmatpush2.bf16.msra.mxu0 %v417
    %533 = vmatprep.subr.bf16.mxu0 %v414
    %534 = vmatpush2.bf16.msra.mxu0 %v413
    %535 = vmatprep.subr.bf16.mxu0 %v410
    %536 = vmatpush2.bf16.msra.mxu0 %v409
    %537 = vmatprep.mubr.bf16.mxu0 %v98
    %538 = vmatmul.mubr.bf16.gmra.mxu0 %v97
    %v539 = vpop.f32.mrf.mxu0
    %v540 = vadd.f32 %v168, %v539
    %v541 = vpop.f32.mrf.mxu0
    %v542 = vadd.f32 %v172, %v541
    %v543 = vpop.f32.mrf.mxu0
    %v544 = vadd.f32 %v168, %v543
    %v545 = vpop.f32.mrf.mxu0
    %v546 = vadd.f32 %v172, %v545
    %547 = vdwg.mxu0
    %548 = vmatprep.subr.bf16.mxu0 %v408
    %549 = vmatpush1.bf16.msra.mxu0 %v407
    %550 = vmatprep.subr.bf16.mxu0 %v404
    %551 = vmatpush1.bf16.msra.mxu0 %v403
    %552 = vmatprep.subr.bf16.mxu0 %v400
    %553 = vmatpush1.bf16.msra.mxu0 %v399
    %554 = vmatprep.subr.bf16.mxu0 %v396
    %555 = vmatpush1.bf16.msra.mxu0 %v395
    %556 = vmatprep.subr.bf16.mxu0 %v392
    %557 = vmatpush1.bf16.msra.mxu0 %v391
    %558 = vmatprep.subr.bf16.mxu0 %v388
    %559 = vmatpush1.bf16.msra.mxu0 %v387
    %560 = vmatprep.subr.bf16.mxu0 %v384
    %561 = vmatpush1.bf16.msra.mxu0 %v383
    %562 = vmatprep.subr.bf16.mxu0 %v380
    %563 = vmatpush1.bf16.msra.mxu0 %v379
    %564 = vmatprep.subr.bf16.mxu0 %v440
    %565 = vmatpush2.bf16.msra.mxu0 %v439
    %566 = vmatprep.subr.bf16.mxu0 %v436
    %567 = vmatpush2.bf16.msra.mxu0 %v435
    %568 = vmatprep.subr.bf16.mxu0 %v432
    %569 = vmatpush2.bf16.msra.mxu0 %v431
    %570 = vmatprep.subr.bf16.mxu0 %v428
    %571 = vmatpush2.bf16.msra.mxu0 %v427
    %572 = vmatprep.subr.bf16.mxu0 %v424
    %573 = vmatpush2.bf16.msra.mxu0 %v423
    %574 = vmatprep.subr.bf16.mxu0 %v420
    %575 = vmatpush2.bf16.msra.mxu0 %v419
    %576 = vmatprep.subr.bf16.mxu0 %v416
    %577 = vmatpush2.bf16.msra.mxu0 %v415
    %578 = vmatprep.subr.bf16.mxu0 %v412
    %579 = vmatpush2.bf16.msra.mxu0 %v411
    %580 = vmatprep.mubr.bf16.mxu0 %v98
    %581 = vmatmul.mubr.bf16.gmra.mxu0 %v97
    %v582 = vpop.f32.mrf.mxu0
    %v583 = vadd.f32 %v176, %v582
    %v584 = vpop.f32.mrf.mxu0
    %v585 = vadd.f32 %v180, %v584
    %v586 = vpop.f32.mrf.mxu0
    %v587 = vadd.f32 %v176, %v586
    %v588 = vpop.f32.mrf.mxu0
    %v589 = vadd.f32 %v180, %v588
    %590 = vdwg.mxu0
    %v591 = vmax.f32 %v540, 0.0
    %v592 = vmax.f32 %v542, 0.0
    %v593 = vmax.f32 %v583, 0.0
    %v594 = vmax.f32 %v585, 0.0
    %v595 = vmax.f32 %v544, 0.0
    %v596 = vmax.f32 %v546, 0.0
    %v597 = vmax.f32 %v587, 0.0
    %v598 = vmax.f32 %v589, 0.0
    %v599 = vld [vmem:[#allocation2] sm:$0xff]
    %v600 = vld [vmem:[#allocation2 + $0x8] sm:$0xff]
    %v601 = vld [vmem:[#allocation2 + $0x10] sm:$0xff]
    %v602 = vld [vmem:[#allocation2 + $0x18] sm:$0xff]
    %v603 = vpack.c.bf16 %v595, %v591
    %v604 = vpack.c.bf16 %v596, %v592
    %v605 = vpack.c.bf16 %v597, %v593
    %v606 = vpack.c.bf16 %v598, %v594
    %v607 = vld [vmem:[#allocation9] sm:$0xff]
    %v608 = vld [vmem:[#allocation9 + $0x8] sm:$0xff]
    %v609 = vld [vmem:[#allocation9 + $0x10] sm:$0xff]
    %v610 = vld [vmem:[#allocation9 + $0x18] sm:$0xff]
    %v611 = vld [vmem:[#allocation9 + $0x20] sm:$0xff]
    %v612 = vld [vmem:[#allocation9 + $0x28] sm:$0xff]
    %v613 = vld [vmem:[#allocation9 + $0x30] sm:$0xff]
    %v614 = vld [vmem:[#allocation9 + $0x38] sm:$0xff]
    %v615 = vld [vmem:[#allocation9 + $0x40] sm:$0xff]
    %v616 = vld [vmem:[#allocation9 + $0x48] sm:$0xff]
    %v617 = vld [vmem:[#allocation9 + $0x50] sm:$0xff]
    %v618 = vld [vmem:[#allocation9 + $0x58] sm:$0xff]
    %v619 = vld [vmem:[#allocation9 + $0x60] sm:$0xff]
    %v620 = vld [vmem:[#allocation9 + $0x68] sm:$0xff]
    %v621 = vld [vmem:[#allocation9 + $0x70] sm:$0xff]
    %v622 = vld [vmem:[#allocation9 + $0x78] sm:$0xff]
    %v623 = vld [vmem:[#allocation9 + $0x80] sm:$0xff]
    %v624 = vld [vmem:[#allocation9 + $0x88] sm:$0xff]
    %v625 = vld [vmem:[#allocation9 + $0x90] sm:$0xff]
    %v626 = vld [vmem:[#allocation9 + $0x98] sm:$0xff]
    %v627 = vld [vmem:[#allocation9 + $0xa0] sm:$0xff]
    %v628 = vld [vmem:[#allocation9 + $0xa8] sm:$0xff]
    %v629 = vld [vmem:[#allocation9 + $0xb0] sm:$0xff]
    %v630 = vld [vmem:[#allocation9 + $0xb8] sm:$0xff]
    %v631 = vld [vmem:[#allocation9 + $0xc0] sm:$0xff]
    %v632 = vld [vmem:[#allocation9 + $0xc8] sm:$0xff]
    %v633 = vld [vmem:[#allocation9 + $0xd0] sm:$0xff]
    %v634 = vld [vmem:[#allocation9 + $0xd8] sm:$0xff]
    %v635 = vld [vmem:[#allocation9 + $0xe0] sm:$0xff]
    %v636 = vld [vmem:[#allocation9 + $0xe8] sm:$0xff]
    %v637 = vld [vmem:[#allocation9 + $0xf0] sm:$0xff]
    %v638 = vld [vmem:[#allocation9 + $0xf8] sm:$0xff]
    %v639 = vld [vmem:[#allocation9 + $0x100] sm:$0xff]
    %v640 = vld [vmem:[#allocation9 + $0x108] sm:$0xff]
    %v641 = vld [vmem:[#allocation9 + $0x110] sm:$0xff]
    %v642 = vld [vmem:[#allocation9 + $0x118] sm:$0xff]
    %v643 = vld [vmem:[#allocation9 + $0x120] sm:$0xff]
    %v644 = vld [vmem:[#allocation9 + $0x128] sm:$0xff]
    %v645 = vld [vmem:[#allocation9 + $0x130] sm:$0xff]
    %v646 = vld [vmem:[#allocation9 + $0x138] sm:$0xff]
    %v647 = vld [vmem:[#allocation9 + $0x140] sm:$0xff]
    %v648 = vld [vmem:[#allocation9 + $0x148] sm:$0xff]
    %v649 = vld [vmem:[#allocation9 + $0x150] sm:$0xff]
    %v650 = vld [vmem:[#allocation9 + $0x158] sm:$0xff]
    %v651 = vld [vmem:[#allocation9 + $0x160] sm:$0xff]
    %v652 = vld [vmem:[#allocation9 + $0x168] sm:$0xff]
    %v653 = vld [vmem:[#allocation9 + $0x170] sm:$0xff]
    %v654 = vld [vmem:[#allocation9 + $0x178] sm:$0xff]
    %v655 = vld [vmem:[#allocation9 + $0x180] sm:$0xff]
    %v656 = vld [vmem:[#allocation9 + $0x188] sm:$0xff]
    %v657 = vld [vmem:[#allocation9 + $0x190] sm:$0xff]
    %v658 = vld [vmem:[#allocation9 + $0x198] sm:$0xff]
    %v659 = vld [vmem:[#allocation9 + $0x1a0] sm:$0xff]
    %v660 = vld [vmem:[#allocation9 + $0x1a8] sm:$0xff]
    %v661 = vld [vmem:[#allocation9 + $0x1b0] sm:$0xff]
    %v662 = vld [vmem:[#allocation9 + $0x1b8] sm:$0xff]
    %v663 = vld [vmem:[#allocation9 + $0x1c0] sm:$0xff]
    %v664 = vld [vmem:[#allocation9 + $0x1c8] sm:$0xff]
    %v665 = vld [vmem:[#allocation9 + $0x1d0] sm:$0xff]
    %v666 = vld [vmem:[#allocation9 + $0x1d8] sm:$0xff]
    %v667 = vld [vmem:[#allocation9 + $0x1e0] sm:$0xff]
    %v668 = vld [vmem:[#allocation9 + $0x1e8] sm:$0xff]
    %v669 = vld [vmem:[#allocation9 + $0x1f0] sm:$0xff]
    %v670 = vld [vmem:[#allocation9 + $0x1f8] sm:$0xff]
    %v735 = vunpack.c.l.b16 %v607
    %v736 = vunpack.c.h.b16 %v607
    %v737 = vunpack.c.l.b16 %v608
    %v738 = vunpack.c.h.b16 %v608
    %v739 = vunpack.c.l.b16 %v609
    %v740 = vunpack.c.h.b16 %v609
    %v741 = vunpack.c.l.b16 %v610
    %v742 = vunpack.c.h.b16 %v610
    %v743 = vunpack.c.l.b16 %v611
    %v744 = vunpack.c.h.b16 %v611
    %v745 = vunpack.c.l.b16 %v612
    %v746 = vunpack.c.h.b16 %v612
    %v747 = vunpack.c.l.b16 %v613
    %v748 = vunpack.c.h.b16 %v613
    %v749 = vunpack.c.l.b16 %v614
    %v750 = vunpack.c.h.b16 %v614
    %v751 = vunpack.c.l.b16 %v615
    %v752 = vunpack.c.h.b16 %v615
    %v753 = vunpack.c.l.b16 %v616
    %v754 = vunpack.c.h.b16 %v616
    %v755 = vunpack.c.l.b16 %v617
    %v756 = vunpack.c.h.b16 %v617
    %v757 = vunpack.c.l.b16 %v618
    %v758 = vunpack.c.h.b16 %v618
    %v759 = vunpack.c.l.b16 %v619
    %v760 = vunpack.c.h.b16 %v619
    %v761 = vunpack.c.l.b16 %v620
    %v762 = vunpack.c.h.b16 %v620
    %v763 = vunpack.c.l.b16 %v621
    %v764 = vunpack.c.h.b16 %v621
    %v765 = vunpack.c.l.b16 %v622
    %v766 = vunpack.c.h.b16 %v622
    %v767 = vunpack.c.l.b16 %v623
    %v768 = vunpack.c.h.b16 %v623
    %v769 = vunpack.c.l.b16 %v624
    %v770 = vunpack.c.h.b16 %v624
    %v771 = vunpack.c.l.b16 %v625
    %v772 = vunpack.c.h.b16 %v625
    %v773 = vunpack.c.l.b16 %v626
    %v774 = vunpack.c.h.b16 %v626
    %v775 = vunpack.c.l.b16 %v627
    %v776 = vunpack.c.h.b16 %v627
    %v777 = vunpack.c.l.b16 %v628
    %v778 = vunpack.c.h.b16 %v628
    %v779 = vunpack.c.l.b16 %v629
    %v780 = vunpack.c.h.b16 %v629
    %v781 = vunpack.c.l.b16 %v630
    %v782 = vunpack.c.h.b16 %v630
    %v783 = vunpack.c.l.b16 %v631
    %v784 = vunpack.c.h.b16 %v631
    %v785 = vunpack.c.l.b16 %v632
    %v786 = vunpack.c.h.b16 %v632
    %v787 = vunpack.c.l.b16 %v633
    %v788 = vunpack.c.h.b16 %v633
    %v789 = vunpack.c.l.b16 %v634
    %v790 = vunpack.c.h.b16 %v634
    %v791 = vunpack.c.l.b16 %v635
    %v792 = vunpack.c.h.b16 %v635
    %v793 = vunpack.c.l.b16 %v636
    %v794 = vunpack.c.h.b16 %v636
    %v795 = vunpack.c.l.b16 %v637
    %v796 = vunpack.c.h.b16 %v637
    %v797 = vunpack.c.l.b16 %v638
    %v798 = vunpack.c.h.b16 %v638
    %v799 = vunpack.c.l.b16 %v639
    %v800 = vunpack.c.h.b16 %v639
    %v801 = vunpack.c.l.b16 %v640
    %v802 = vunpack.c.h.b16 %v640
    %v803 = vunpack.c.l.b16 %v641
    %v804 = vunpack.c.h.b16 %v641
    %v805 = vunpack.c.l.b16 %v642
    %v806 = vunpack.c.h.b16 %v642
    %v807 = vunpack.c.l.b16 %v643
    %v808 = vunpack.c.h.b16 %v643
    %v809 = vunpack.c.l.b16 %v644
    %v810 = vunpack.c.h.b16 %v644
    %v811 = vunpack.c.l.b16 %v645
    %v812 = vunpack.c.h.b16 %v645
    %v813 = vunpack.c.l.b16 %v646
    %v814 = vunpack.c.h.b16 %v646
    %v815 = vunpack.c.l.b16 %v647
    %v816 = vunpack.c.h.b16 %v647
    %v817 = vunpack.c.l.b16 %v648
    %v818 = vunpack.c.h.b16 %v648
    %v819 = vunpack.c.l.b16 %v649
    %v820 = vunpack.c.h.b16 %v649
    %v821 = vunpack.c.l.b16 %v650
    %v822 = vunpack.c.h.b16 %v650
    %v823 = vunpack.c.l.b16 %v651
    %v824 = vunpack.c.h.b16 %v651
    %v825 = vunpack.c.l.b16 %v652
    %v826 = vunpack.c.h.b16 %v652
    %v827 = vunpack.c.l.b16 %v653
    %v828 = vunpack.c.h.b16 %v653
    %v829 = vunpack.c.l.b16 %v654
    %v830 = vunpack.c.h.b16 %v654
    %v831 = vunpack.c.l.b16 %v655
    %v832 = vunpack.c.h.b16 %v655
    %v833 = vunpack.c.l.b16 %v656
    %v834 = vunpack.c.h.b16 %v656
    %v835 = vunpack.c.l.b16 %v657
    %v836 = vunpack.c.h.b16 %v657
    %v837 = vunpack.c.l.b16 %v658
    %v838 = vunpack.c.h.b16 %v658
    %v839 = vunpack.c.l.b16 %v659
    %v840 = vunpack.c.h.b16 %v659
    %v841 = vunpack.c.l.b16 %v660
    %v842 = vunpack.c.h.b16 %v660
    %v843 = vunpack.c.l.b16 %v661
    %v844 = vunpack.c.h.b16 %v661
    %v845 = vunpack.c.l.b16 %v662
    %v846 = vunpack.c.h.b16 %v662
    %v847 = vunpack.c.l.b16 %v663
    %v848 = vunpack.c.h.b16 %v663
    %v849 = vunpack.c.l.b16 %v664
    %v850 = vunpack.c.h.b16 %v664
    %v851 = vunpack.c.l.b16 %v665
    %v852 = vunpack.c.h.b16 %v665
    %v853 = vunpack.c.l.b16 %v666
    %v854 = vunpack.c.h.b16 %v666
    %v855 = vunpack.c.l.b16 %v667
    %v856 = vunpack.c.h.b16 %v667
    %v857 = vunpack.c.l.b16 %v668
    %v858 = vunpack.c.h.b16 %v668
    %v859 = vunpack.c.l.b16 %v669
    %v860 = vunpack.c.h.b16 %v669
    %v861 = vunpack.c.l.b16 %v670
    %v862 = vunpack.c.h.b16 %v670
    %v863 = vpack.c.b16 %v737, %v735
    %v864 = vpack.c.b16 %v738, %v736
    %v865 = vpack.c.b16 %v741, %v739
    %v866 = vpack.c.b16 %v742, %v740
    %v867 = vpack.c.b16 %v745, %v743
    %v868 = vpack.c.b16 %v746, %v744
    %v869 = vpack.c.b16 %v749, %v747
    %v870 = vpack.c.b16 %v750, %v748
    %v871 = vpack.c.b16 %v753, %v751
    %v872 = vpack.c.b16 %v754, %v752
    %v873 = vpack.c.b16 %v757, %v755
    %v874 = vpack.c.b16 %v758, %v756
    %v875 = vpack.c.b16 %v761, %v759
    %v876 = vpack.c.b16 %v762, %v760
    %v877 = vpack.c.b16 %v765, %v763
    %v878 = vpack.c.b16 %v766, %v764
    %v879 = vpack.c.b16 %v769, %v767
    %v880 = vpack.c.b16 %v770, %v768
    %v881 = vpack.c.b16 %v773, %v771
    %v882 = vpack.c.b16 %v774, %v772
    %v883 = vpack.c.b16 %v777, %v775
    %v884 = vpack.c.b16 %v778, %v776
    %v885 = vpack.c.b16 %v781, %v779
    %v886 = vpack.c.b16 %v782, %v780
    %v887 = vpack.c.b16 %v785, %v783
    %v888 = vpack.c.b16 %v786, %v784
    %v889 = vpack.c.b16 %v789, %v787
    %v890 = vpack.c.b16 %v790, %v788
    %v891 = vpack.c.b16 %v793, %v791
    %v892 = vpack.c.b16 %v794, %v792
    %v893 = vpack.c.b16 %v797, %v795
    %v894 = vpack.c.b16 %v798, %v796
    %v895 = vpack.c.b16 %v801, %v799
    %v896 = vpack.c.b16 %v802, %v800
    %v897 = vpack.c.b16 %v805, %v803
    %v898 = vpack.c.b16 %v806, %v804
    %v899 = vpack.c.b16 %v809, %v807
    %v900 = vpack.c.b16 %v810, %v808
    %v901 = vpack.c.b16 %v813, %v811
    %v902 = vpack.c.b16 %v814, %v812
    %v903 = vpack.c.b16 %v817, %v815
    %v904 = vpack.c.b16 %v818, %v816
    %v905 = vpack.c.b16 %v821, %v819
    %v906 = vpack.c.b16 %v822, %v820
    %v907 = vpack.c.b16 %v825, %v823
    %v908 = vpack.c.b16 %v826, %v824
    %v909 = vpack.c.b16 %v829, %v827
    %v910 = vpack.c.b16 %v830, %v828
    %v911 = vpack.c.b16 %v833, %v831
    %v912 = vpack.c.b16 %v834, %v832
    %v913 = vpack.c.b16 %v837, %v835
    %v914 = vpack.c.b16 %v838, %v836
    %v915 = vpack.c.b16 %v841, %v839
    %v916 = vpack.c.b16 %v842, %v840
    %v917 = vpack.c.b16 %v845, %v843
    %v918 = vpack.c.b16 %v846, %v844
    %v919 = vpack.c.b16 %v849, %v847
    %v920 = vpack.c.b16 %v850, %v848
    %v921 = vpack.c.b16 %v853, %v851
    %v922 = vpack.c.b16 %v854, %v852
    %v923 = vpack.c.b16 %v857, %v855
    %v924 = vpack.c.b16 %v858, %v856
    %v925 = vpack.c.b16 %v861, %v859
    %v926 = vpack.c.b16 %v862, %v860
    %991 = vmatprep.subr.bf16.mxu0 %v878
    %992 = vmatpush1.bf16.msra.mxu0 %v877
    %993 = vmatprep.subr.bf16.mxu0 %v876
    %994 = vmatpush1.bf16.msra.mxu0 %v875
    %995 = vmatprep.subr.bf16.mxu0 %v874
    %996 = vmatpush1.bf16.msra.mxu0 %v873
    %997 = vmatprep.subr.bf16.mxu0 %v872
    %998 = vmatpush1.bf16.msra.mxu0 %v871
    %999 = vmatprep.subr.bf16.mxu0 %v870
    %1000 = vmatpush1.bf16.msra.mxu0 %v869
    %1001 = vmatprep.subr.bf16.mxu0 %v868
    %1002 = vmatpush1.bf16.msra.mxu0 %v867
    %1003 = vmatprep.subr.bf16.mxu0 %v866
    %1004 = vmatpush1.bf16.msra.mxu0 %v865
    %1005 = vmatprep.subr.bf16.mxu0 %v864
    %1006 = vmatpush1.bf16.msra.mxu0 %v863
    %1007 = vmatprep.subr.bf16.mxu0 %v894
    %1008 = vmatpush2.bf16.msra.mxu0 %v893
    %1009 = vmatprep.subr.bf16.mxu0 %v892
    %1010 = vmatpush2.bf16.msra.mxu0 %v891
    %1011 = vmatprep.subr.bf16.mxu0 %v890
    %1012 = vmatpush2.bf16.msra.mxu0 %v889
    %1013 = vmatprep.subr.bf16.mxu0 %v888
    %1014 = vmatpush2.bf16.msra.mxu0 %v887
    %1015 = vmatprep.subr.bf16.mxu0 %v886
    %1016 = vmatpush2.bf16.msra.mxu0 %v885
    %1017 = vmatprep.subr.bf16.mxu0 %v884
    %1018 = vmatpush2.bf16.msra.mxu0 %v883
    %1019 = vmatprep.subr.bf16.mxu0 %v882
    %1020 = vmatpush2.bf16.msra.mxu0 %v881
    %1021 = vmatprep.subr.bf16.mxu0 %v880
    %1022 = vmatpush2.bf16.msra.mxu0 %v879
    %1023 = vmatprep.mubr.bf16.mxu0 %v604
    %1024 = vmatmul.mubr.bf16.gmra.mxu0 %v603
    %v1025 = vpop.f32.mrf.mxu0
    %v1026 = vadd.f32 0.0, %v1025
    %v1027 = vpop.f32.mrf.mxu0
    %v1028 = vadd.f32 0.0, %v1027
    %v1029 = vpop.f32.mrf.mxu0
    %v1030 = vadd.f32 0.0, %v1029
    %v1031 = vpop.f32.mrf.mxu0
    %v1032 = vadd.f32 0.0, %v1031
    %1033 = vdwg.mxu0
    %1034 = vmatprep.subr.bf16.mxu0 %v910
    %1035 = vmatpush1.bf16.msra.mxu0 %v909
    %1036 = vmatprep.subr.bf16.mxu0 %v908
    %1037 = vmatpush1.bf16.msra.mxu0 %v907
    %1038 = vmatprep.subr.bf16.mxu0 %v906
    %1039 = vmatpush1.bf16.msra.mxu0 %v905
    %1040 = vmatprep.subr.bf16.mxu0 %v904
    %1041 = vmatpush1.bf16.msra.mxu0 %v903
    %1042 = vmatprep.subr.bf16.mxu0 %v902
    %1043 = vmatpush1.bf16.msra.mxu0 %v901
    %1044 = vmatprep.subr.bf16.mxu0 %v900
    %1045 = vmatpush1.bf16.msra.mxu0 %v899
    %1046 = vmatprep.subr.bf16.mxu0 %v898
    %1047 = vmatpush1.bf16.msra.mxu0 %v897
    %1048 = vmatprep.subr.bf16.mxu0 %v896
    %1049 = vmatpush1.bf16.msra.mxu0 %v895
    %1050 = vmatprep.subr.bf16.mxu0 %v926
    %1051 = vmatpush2.bf16.msra.mxu0 %v925
    %1052 = vmatprep.subr.bf16.mxu0 %v924
    %1053 = vmatpush2.bf16.msra.mxu0 %v923
    %1054 = vmatprep.subr.bf16.mxu0 %v922
    %1055 = vmatpush2.bf16.msra.mxu0 %v921
    %1056 = vmatprep.subr.bf16.mxu0 %v920
    %1057 = vmatpush2.bf16.msra.mxu0 %v919
    %1058 = vmatprep.subr.bf16.mxu0 %v918
    %1059 = vmatpush2.bf16.msra.mxu0 %v917
    %1060 = vmatprep.subr.bf16.mxu0 %v916
    %1061 = vmatpush2.bf16.msra.mxu0 %v915
    %1062 = vmatprep.subr.bf16.mxu0 %v914
    %1063 = vmatpush2.bf16.msra.mxu0 %v913
    %1064 = vmatprep.subr.bf16.mxu0 %v912
    %1065 = vmatpush2.bf16.msra.mxu0 %v911
    %1066 = vmatprep.mubr.bf16.mxu0 %v606
    %1067 = vmatmul.mubr.bf16.gmra.mxu0 %v605
    %v1068 = vpop.f32.mrf.mxu0
    %v1069 = vadd.f32 %v1026, %v1068
    %v1070 = vpop.f32.mrf.mxu0
    %v1071 = vadd.f32 %v1028, %v1070
    %v1072 = vpop.f32.mrf.mxu0
    %v1073 = vadd.f32 %v1030, %v1072
    %v1074 = vpop.f32.mrf.mxu0
    %v1075 = vadd.f32 %v1032, %v1074
    %1076 = vdwg.mxu0
    %v1077 = vadd.f32 %v599, %v1069
    %v1078 = vadd.f32 %v600, %v1071
    %v1079 = vadd.f32 %v601, %v1073
    %v1080 = vadd.f32 %v602, %v1075
    %1081 = vst [vmem:[#allocation2] sm:$0xff] %v1077
    %1082 = vst [vmem:[#allocation2 + $0x8] sm:$0xff] %v1078
    %1083 = vst [vmem:[#allocation2 + $0x10] sm:$0xff] %v1079
    %1084 = vst [vmem:[#allocation2 + $0x18] sm:$0xff] %v1080
    // Predicated region
    $region46: #{tpu_custom_call.1} parent=1 // pred_check
      %p1085 = pneg %p85
    $region47: #{tpu_custom_call.1} parent=1 // pred_check_branch
      %1087 = sbr.rel (%p1085) target = $region49
    $region48: #{tpu_custom_call.1} parent=1 // pred_region
      %v1088 = vld [vmem:[#allocation11] sm:$0x77]
      %v1089 = vld [vmem:[#allocation2] sm:$0xff]
      %v1090 = vld [vmem:[#allocation2 + $0x8] sm:$0xff]
      %v1091 = vld [vmem:[#allocation2 + $0x10] sm:$0xff]
      %v1092 = vld [vmem:[#allocation2 + $0x18] sm:$0xff]
      %v1094 = vlaneseq
      %v1095 = vshrl.u32 %v1094, 7
      %v1096 = vsub.s32 0, %v1095
      %v1097 = vrot.slane %v1088, %v1096
      %v1098 = vlaneseq
      %v1099 = vshrl.u32 %v1098, 7
      %v1100 = vsub.s32 4, %v1099
      %v1101 = vrot.slane %v1088, %v1100
      %v1104 = vlaneseq
      %v1105 = vshrl.u32 %v1104, 7
      %v1106 = vsub.s32 0, %v1105
      %v1107 = vrot.slane %v1097, %v1106
      %v1108 = vlaneseq
      %v1109 = vshrl.u32 %v1108, 7
      %v1110 = vsub.s32 0, %v1109
      %v1111 = vrot.slane %v1101, %v1110
      %v1112 = vadd.f32 %v1089, %v1107
      %v1113 = vadd.f32 %v1090, %v1111
      %v1114 = vadd.f32 %v1091, %v1107
      %v1115 = vadd.f32 %v1092, %v1111
      %v1116 = vadd.f32 %v1112, %v93
      %v1117 = vadd.f32 %v1113, %v94
      %v1118 = vadd.f32 %v1114, %v95
      %v1119 = vadd.f32 %v1115, %v96
      %v1120 = vadd.f32 %v1116, %v1117
      %1121 = vadd.xlane.f32.xlu0 %v1120
      %v1122 = vpop.xlane.xlu0 %1121
      %v1123 = vadd.f32 %v1118, %v1119
      %1124 = vadd.xlane.f32.xlu0 %v1123
      %v1125 = vpop.xlane.xlu0 %1124
      %v1126 = vrcp.pop 256.0
      %v1127 = vmul.f32 %v1122, %v1126
      %v1128 = vmul.f32 %v1125, %v1126
      %v1129 = vsub.f32 %v1116, %v1127
      %v1130 = vsub.f32 %v1117, %v1127
      %v1131 = vsub.f32 %v1118, %v1128
      %v1132 = vsub.f32 %v1119, %v1128
      %v1133 = vmul.f32 %v1129, %v1129
      %v1134 = vmul.f32 %v1130, %v1130
      %v1135 = vmul.f32 %v1131, %v1131
      %v1136 = vmul.f32 %v1132, %v1132
      %v1137 = vadd.f32 %v1133, %v1134
      %1138 = vadd.xlane.f32.xlu0 %v1137
      %v1139 = vpop.xlane.xlu0 %1138
      %v1140 = vadd.f32 %v1135, %v1136
      %1141 = vadd.xlane.f32.xlu0 %v1140
      %v1142 = vpop.xlane.xlu0 %1141
      %v1143 = vmul.f32 %v1139, %v1126
      %v1144 = vmul.f32 %v1142, %v1126
      %v1145 = vadd.f32 %v1143, 1e-06
      %v1146 = vadd.f32 %v1144, 1e-06
      %v1147 = vrsqrt.pop %v1145
      %v1148 = vrsqrt.pop %v1146
      %v1149 = vmul.f32 %v1129, %v1147
      %v1150 = vmul.f32 %v1130, %v1147
      %v1151 = vmul.f32 %v1131, %v1148
      %v1152 = vmul.f32 %v1132, %v1148
      %v1153 = vlaneseq
      %v1154 = vshrl.u32 %v1153, 7
      %v1155 = vsub.s32 1, %v1154
      %v1156 = vrot.slane %v1088, %v1155
      %v1157 = vlaneseq
      %v1158 = vshrl.u32 %v1157, 7
      %v1159 = vsub.s32 5, %v1158
      %v1160 = vrot.slane %v1088, %v1159
      %v1163 = vlaneseq
      %v1164 = vshrl.u32 %v1163, 7
      %v1165 = vsub.s32 1, %v1164
      %v1166 = vrot.slane %v1156, %v1165
      %v1167 = vlaneseq
      %v1168 = vshrl.u32 %v1167, 7
      %v1169 = vsub.s32 1, %v1168
      %v1170 = vrot.slane %v1160, %v1169
      %v1171 = vmul.f32 %v1149, %v1166
      %v1172 = vmul.f32 %v1150, %v1170
      %v1173 = vmul.f32 %v1151, %v1166
      %v1174 = vmul.f32 %v1152, %v1170
      %v1175 = vlaneseq
      %v1176 = vshrl.u32 %v1175, 7
      %v1177 = vsub.s32 2, %v1176
      %v1178 = vrot.slane %v1088, %v1177
      %v1179 = vlaneseq
      %v1180 = vshrl.u32 %v1179, 7
      %v1181 = vsub.s32 6, %v1180
      %v1182 = vrot.slane %v1088, %v1181
      %v1185 = vlaneseq
      %v1186 = vshrl.u32 %v1185, 7
      %v1187 = vsub.s32 2, %v1186
      %v1188 = vrot.slane %v1178, %v1187
      %v1189 = vlaneseq
      %v1190 = vshrl.u32 %v1189, 7
      %v1191 = vsub.s32 2, %v1190
      %v1192 = vrot.slane %v1182, %v1191
      %v1193 = vadd.f32 %v1171, %v1188
      %v1194 = vadd.f32 %v1172, %v1192
      %v1195 = vadd.f32 %v1173, %v1188
      %v1196 = vadd.f32 %v1174, %v1192
      %1197 = vst [vmem:[#allocation12] sm:$0xff] %v1193
      %1198 = vst [vmem:[#allocation12 + $0x8] sm:$0xff] %v1194
      %1199 = vst [vmem:[#allocation12 + $0x10] sm:$0xff] %v1195
      %1200 = vst [vmem:[#allocation12 + $0x18] sm:$0xff] %v1196
    $region49: #{tpu_custom_call.1} parent=1 // pred_fallthru
      _
    // Predicated region
    $region50: #{tpu_custom_call.1} parent=1 // pred_check
      _
    $region51: #{tpu_custom_call.1} parent=1 // pred_check_branch
      %1202 = sbr.rel (0) target = $region53
    $region52: #{tpu_custom_call.1} parent=1 // pred_region
      %s1204 = ssub.s32 512, 512
      %1205 = vsyncadd [#allocation5], %s1204
      %s1206 = sshll.u32 [#allocation12], 4
      %s1207 = int_to_ptr.vmem [resolvable:$true] %s1206
      %1212 = dma.vmem_to_hbm [thread:$0]  %s1207, 512, %s5, [#allocation5], 256, 256, 16
    $region53: #{tpu_custom_call.1} parent=1 // pred_fallthru
      _
    // Predicated region
    $region54: #{tpu_custom_call.1} parent=1 // pred_check
      _
    $region55: #{tpu_custom_call.1} parent=1 // pred_check_branch
      %1214 = sbr.rel (0) target = $region57
    $region56: #{tpu_custom_call.1} parent=1 // pred_region
      %1215 = dma.done [#allocation5], 512
    $region57: #{tpu_custom_call.1} parent=1 // pred_fallthru
      _
    %1216 = vsyncpa [#allocation4], 1
    %1217 = vsyncpa [#allocation7], 1
    %1218 = vsyncpa [#allocation10], 1
    %1219 = vsyncpa [#allocation5], 1

</llo_original>
